<compile_context>
chip_gen: v7x
topology: tpu7x:2x2x1
jax: 0.10.0
libtpu: 0.0.40
codegen_flags: <defaults>
</compile_context>

<pallas_src>
import functools

import jax
import jax.numpy as jnp
from jax import lax
from jax.experimental import pallas as pl
from jax.experimental.pallas import tpu as pltpu


_RESIDENT_RHS_LIMIT_BYTES = 8 * 1024 * 1024   # keep XW1 / HW2 VMEM-resident below this


def _round_up(x, m):
    return (x + m - 1) // m * m


def choose_node_padding(num_nodes):
    """Pad N to a multiple of 512/256 when the extra zero rows cost < 15% more
    adjacency bytes; otherwise the minimum multiple of 128."""
    n128 = _round_up(num_nodes, 128)
    for m in (512, 256):
        nm = _round_up(num_nodes, m)
        if nm * nm <= 1.15 * n128 * n128:
            return nm
    return n128


# ---------------------------------------------------------------------------
# Kernel 1: hw2 = relu(A_hat @ XW1) @ W2   (layer-1 aggregate + layer-2 linear)
# ---------------------------------------------------------------------------
def _layer1_kernel(tk, rhs_resident, adj_ref, xw1_ref, w2_ref, hw2_ref, acc_ref):
    k = pl.program_id(1)

    @pl.when(k == 0)
    def _init():
        acc_ref[...] = jnp.zeros_like(acc_ref)

    # int8 (or bf16/f32) adjacency tile -> bf16 for the MXU; the VPU cast
    # hides under the adjacency DMA.
    adj_tile = adj_ref[...].astype(jnp.float32).astype(jnp.bfloat16)
    if rhs_resident:
        xw1_tile = xw1_ref[pl.ds(pl.multiple_of(k * tk, tk), tk), :]
    else:
        xw1_tile = xw1_ref[...]
    acc_ref[...] += jnp.dot(adj_tile, xw1_tile,
                            preferred_element_type=jnp.float32)

    @pl.when(k == pl.num_programs(1) - 1)
    def _finalize():
        h1 = jnp.maximum(acc_ref[...], 0.0)                       # ReLU in f32
        hw2_ref[...] = jnp.dot(h1.astype(jnp.bfloat16), w2_ref[...],
                               preferred_element_type=jnp.float32
                               ).astype(hw2_ref.dtype)


# ---------------------------------------------------------------------------
# Kernel 2: out = log_softmax(A_hat @ HW2, axis=1)
# ---------------------------------------------------------------------------
def _layer2_kernel(tk, rhs_resident, valid_cols, adj_ref, hw2_ref, out_ref, acc_ref):
    k = pl.program_id(1)

    @pl.when(k == 0)
    def _init():
        acc_ref[...] = jnp.zeros_like(acc_ref)

    adj_tile = adj_ref[...].astype(jnp.float32).astype(jnp.bfloat16)
    if rhs_resident:
        hw2_tile = hw2_ref[pl.ds(pl.multiple_of(k * tk, tk), tk), :]
    else:
        hw2_tile = hw2_ref[...]
    acc_ref[...] += jnp.dot(adj_tile, hw2_tile,
                            preferred_element_type=jnp.float32)

    @pl.when(k == pl.num_programs(1) - 1)
    def _finalize():
        z = acc_ref[...]                                          # [TM, Fp] f32
        col = lax.broadcasted_iota(jnp.int32, z.shape, 1)
        z = jnp.where(col < valid_cols, z, jnp.float32(-1e30))    # mask padded logits
        m = jnp.max(z, axis=1, keepdims=True)
        shifted = z - m
        lse = jnp.log(jnp.sum(jnp.exp(shifted), axis=1, keepdims=True))
        out_ref[...] = shifted - lse


@functools.partial(jax.jit, static_argnums=(5,))
def gcn_forward_pallas(adj_q, adj_scale, x, w1, w2, num_nodes):
    """adj_q: padded [n_pad, n_pad] int8-quantized (or bf16/f32) adjacency.
    adj_scale: global dequant scale (use 1.0 for an unquantized adjacency)."""
    n_pad = adj_q.shape[0]
    n, f_in = x.shape
    hidden = w1.shape[1]
    f_out = w2.shape[1]

    hp = _round_up(hidden, 128)
    fp = _round_up(f_out, 128)

    # --- tiles: TM prefers >= 2 row tiles (v7x megacore); TK grows to 1k/2k --
    tm_candidates = [t for t in (512, 256, 128) if n_pad % t == 0]
    tm = next((t for t in tm_candidates if n_pad // t >= 2), tm_candidates[0])
    tk = next(t for t in (2048, 1024, 512, 256, 128) if n_pad % t == 0)
    grid = (n_pad // tm, n_pad // tk)
    row_tiles = grid[0]

    xw1_resident = n_pad * hp * 2 <= _RESIDENT_RHS_LIMIT_BYTES
    hw2_resident = n_pad * fp * 2 <= _RESIDENT_RHS_LIMIT_BYTES
    adj_itemsize = adj_q.dtype.itemsize

    # Fold the adjacency dequant scale into the dense operands (no per-tile
    # dequant multiply in-kernel):
    #   A_hat @ XW1        == adj_q @ (s * XW1)
    #   A_hat @ (h1 @ W2)  == adj_q @ (h1 @ (s * W2))
    w1_p = jnp.zeros((f_in, hp), jnp.float32).at[:, :hidden].set(w1)
    w2_p = jnp.zeros((hp, fp), jnp.float32).at[:hidden, :f_out].set(w2 * adj_scale)
    w2_p = w2_p.astype(jnp.bfloat16)

    # Feature-side matmul X @ W1 computed ONCE outside the adj reduction loop
    # (tiny: O(N*Fin*H)); fed to kernel 1 as a bf16 VMEM-resident operand.
    xw1 = jnp.zeros((n_pad, hp), jnp.float32).at[:n].set((x @ w1_p) * adj_scale)
    xw1 = xw1.astype(jnp.bfloat16)

    cparams = pltpu.CompilerParams(
        dimension_semantics=("parallel", "arbitrary"),
        vmem_limit_bytes=48 * 1024 * 1024,
    )

    # ---- pass 1: hw2 = relu(A_hat @ xw1) @ w2  (bf16, lane-dense) ----------
    if xw1_resident:
        xw1_spec = pl.BlockSpec((n_pad, hp), lambda i, k: (0, 0))   # fetched once
    else:
        xw1_spec = pl.BlockSpec((tk, hp), lambda i, k: (k, 0))      # streamed over k
    hw2 = pl.pallas_call(
        functools.partial(_layer1_kernel, tk, xw1_resident),
        out_shape=jax.ShapeDtypeStruct((n_pad, fp), jnp.bfloat16),
        grid_spec=pltpu.PrefetchScalarGridSpec(
            num_scalar_prefetch=0,
            grid=grid,
            in_specs=[
                pl.BlockSpec((tm, tk), lambda i, k: (i, k)),        # adj tile (streamed)
                xw1_spec,
                pl.BlockSpec((hp, fp), lambda i, k: (0, 0)),        # w2 (resident)
            ],
            out_specs=pl.BlockSpec((tm, fp), lambda i, k: (i, 0)),
            scratch_shapes=[pltpu.VMEM((tm, hp), jnp.float32)],
        ),
        compiler_params=cparams,
        cost_estimate=pl.CostEstimate(
            flops=2 * n_pad * n_pad * hp + 2 * n_pad * hp * fp,
            transcendentals=0,
            bytes_accessed=(n_pad * n_pad * adj_itemsize
                            + n_pad * hp * 2 * (1 if xw1_resident else row_tiles)
                            + hp * fp * 2
                            + n_pad * fp * 2),
        ),
    )(adj_q, xw1, w2_p)

    # ---- pass 2: out = log_softmax(A_hat @ hw2) -----------------------------
    if hw2_resident:
        hw2_spec = pl.BlockSpec((n_pad, fp), lambda i, k: (0, 0))   # fetched once
    else:
        hw2_spec = pl.BlockSpec((tk, fp), lambda i, k: (k, 0))      # streamed over k
    out_full = pl.pallas_call(
        functools.partial(_layer2_kernel, tk, hw2_resident, f_out),
        out_shape=jax.ShapeDtypeStruct((n_pad, fp), jnp.float32),
        grid_spec=pltpu.PrefetchScalarGridSpec(
            num_scalar_prefetch=0,
            grid=grid,
            in_specs=[
                pl.BlockSpec((tm, tk), lambda i, k: (i, k)),        # adj tile (streamed)
                hw2_spec,
            ],
            out_specs=pl.BlockSpec((tm, fp), lambda i, k: (i, 0)),
            scratch_shapes=[pltpu.VMEM((tm, fp), jnp.float32)],
        ),
        compiler_params=cparams,
        cost_estimate=pl.CostEstimate(
            flops=2 * n_pad * n_pad * fp,
            transcendentals=n_pad * fp,
            bytes_accessed=(n_pad * n_pad * adj_itemsize
                            + n_pad * fp * 2 * (1 if hw2_resident else row_tiles)
                            + n_pad * fp * 4),
        ),
    )(adj_q, hw2)

    return out_full[:num_nodes, :f_out]


def build_normalized_adj(edge_index, edge_weight, num_nodes, num_nodes_padded=None):
    """Dense A_hat = D^{-1/2}(A + I)D^{-1/2}, PyG gcn_norm with
    flow='target_to_source' (degree over edge_index[0]), built directly at the
    padded shape so no per-forward repack is needed."""
    n_pad = num_nodes if num_nodes_padded is None else num_nodes_padded
    row, col = edge_index[0], edge_index[1]
    if edge_weight is None:
        edge_weight = jnp.ones(row.shape[0], dtype=jnp.float32)
    loop_idx = jnp.arange(num_nodes, dtype=row.dtype)          # self loops
    row = jnp.concatenate([row, loop_idx])
    col = jnp.concatenate([col, loop_idx])
    w = jnp.concatenate([edge_weight, jnp.ones(num_nodes, dtype=jnp.float32)])
    deg = jnp.zeros(num_nodes, dtype=jnp.float32).at[row].add(w)
    deg_inv_sqrt = jnp.where(deg > 0, deg ** -0.5, 0.0)
    norm = deg_inv_sqrt[row] * w * deg_inv_sqrt[col]
    adj = jnp.zeros((n_pad, n_pad), dtype=jnp.float32)
    adj = adj.at[row, col].add(norm)                            # dup edges add
    return adj


def quantize_adj(adj_f32):
    """int8 symmetric quantization with one global scale (values in ~[0, 1.x])."""
    scale = jnp.maximum(jnp.max(jnp.abs(adj_f32)), 1e-12) / 127.0
    adj_q = jnp.clip(jnp.round(adj_f32 / scale), -127.0, 127.0).astype(jnp.int8)
    return adj_q, scale


def glorot(key, shape):
    fan_in, fan_out = shape
    limit = jnp.sqrt(6.0 / (fan_in + fan_out))
    return jax.random.uniform(key, shape, jnp.float32, -limit, limit)


if __name__ == "__main__":
    num_nodes = 16
    in_channels = 4
    hidden_dim = 32
    out_channels = 8
    num_edges = 40

    key = jax.random.PRNGKey(0)
    k_x, k_e, k_w, k_w1, k_w2 = jax.random.split(key, 5)

    x = jax.random.normal(k_x, (num_nodes, in_channels), jnp.float32)
    edge_index = jax.random.randint(k_e, (2, num_edges), 0, num_nodes, jnp.int32)
    edge_weight = jax.random.uniform(k_w, (num_edges,), jnp.float32, 0.5, 1.5)

    # GCNConv linear weights (bias=False), stored [in, out] so X @ W matches
    # PyTorch's x @ weight.T with weight [out, in].
    w1 = glorot(k_w1, (in_channels, hidden_dim))
    w2 = glorot(k_w2, (hidden_dim, out_channels))

    # One-time preprocessing (hoisted out of the per-forward path): padded
    # dense A_hat, int8-quantized with a global scale.
    n_pad = choose_node_padding(num_nodes)
    adj_f32 = build_normalized_adj(edge_index, edge_weight, num_nodes, n_pad)
    adj_q, adj_scale = quantize_adj(adj_f32)

    out = gcn_forward_pallas(adj_q, adj_scale, x, w1, w2, num_nodes)
    out = jax.block_until_ready(out)

    # Pure-JAX f32 reference (loose tolerance: adj is int8, operands bf16 in-kernel).
    adj_ref = adj_f32[:num_nodes, :num_nodes]
    h1_ref = jnp.maximum(adj_ref @ (x @ w1), 0.0)
    z_ref = adj_ref @ (h1_ref @ w2)
    ref = jax.nn.log_softmax(z_ref, axis=1)

    row_sums = jnp.sum(jnp.exp(out), axis=1)
    assert out.shape == (num_nodes, out_channels)
    assert bool(jnp.all(jnp.abs(row_sums - 1.0) < 1e-3))
    assert bool(jnp.max(jnp.abs(out - ref)) < 0.15)

    print("KERNEL_OK")
</pallas_src>

<mosaic_0001>
module attributes {stable_mosaic.version = 11 : i64} {
  func.func @_layer2_kernel(%arg0: i32, %arg1: i32, %arg2: memref<128x128xi8, #tpu.memory_space<vmem>>, %arg3: memref<128x128xbf16, #tpu.memory_space<vmem>>, %arg4: memref<128x128xf32, #tpu.memory_space<vmem>>, %arg5: memref<128x128xf32, #tpu.memory_space<vmem>>) attributes {dimension_semantics = [#tpu.dimension_semantics<parallel>, #tpu.dimension_semantics<arbitrary>], iteration_bounds = array<i64: 1, 1>, scalar_prefetch = 0 : i64, scratch_operands = 1 : i64, tpu.core_type = #tpu.core_type<tc>, window_params = [{transform_indices = @transform_0, window_bounds = array<i64: 128, 128>}, {pipeline_mode = #tpu.pipeline_mode<synchronous>, transform_indices = @transform_1, window_bounds = array<i64: 128, 128>}, {transform_indices = @transform_2, window_bounds = array<i64: 128, 128>}]} {
    %c0_i32 = arith.constant 0 : i32
    %0 = arith.cmpi eq, %arg1, %c0_i32 : i32
    %1 = arith.extui %0 : i1 to i32
    %c0_i32_0 = arith.constant 0 : i32
    %2 = arith.cmpi ne, %1, %c0_i32_0 : i32
    scf.if %2 {
      %cst_9 = arith.constant 0.000000e+00 : f32
      %17 = vector.broadcast %cst_9 : f32 to vector<128x128xf32>
      %c0_10 = arith.constant 0 : index
      %c0_11 = arith.constant 0 : index
      %18 = vector.load %arg5[%c0_10, %c0_11] : memref<128x128xf32, #tpu.memory_space<vmem>>, vector<128x128xf32>
      tpu.vector_store %arg5[%c0_10, %c0_11], %17 {strides = array<i32>} : memref<128x128xf32, #tpu.memory_space<vmem>>, vector<128x128xf32>,
    } else {
    }
    %c0 = arith.constant 0 : index
    %c0_1 = arith.constant 0 : index
    %3 = vector.load %arg2[%c0, %c0_1] : memref<128x128xi8, #tpu.memory_space<vmem>>, vector<128x128xi8>
    %4 = arith.sitofp %3 : vector<128x128xi8> to vector<128x128xf32>
    %5 = arith.truncf %4 : vector<128x128xf32> to vector<128x128xbf16>
    %c128_i32 = arith.constant 128 : i32
    %6 = arith.muli %arg1, %c128_i32 : i32
    %7 = tpu.assume_multiple %6, 128 : i32
    %8 = arith.index_cast %7 : i32 to index
    %c0_2 = arith.constant 0 : index
    %9 = vector.load %arg3[%8, %c0_2] : memref<128x128xbf16, #tpu.memory_space<vmem>>, vector<128x128xbf16>
    %c0_3 = arith.constant 0 : index
    %c0_4 = arith.constant 0 : index
    %10 = vector.load %arg5[%c0_3, %c0_4] : memref<128x128xf32, #tpu.memory_space<vmem>>, vector<128x128xf32>
    %cst = arith.constant dense<0.000000e+00> : vector<128x128xf32>
    %11 = tpu.matmul %5, %9, %cst {dimension_numbers = #tpu.dot_dimension_numbers<[1], [0], [0], [1], [0, 0, 1, 1], [], []>} : vector<128x128xbf16>, vector<128x128xbf16>, vector<128x128xf32> -> vector<128x128xf32>
    %12 = arith.addf %10, %11 : vector<128x128xf32>
    %c0_5 = arith.constant 0 : index
    %c0_6 = arith.constant 0 : index
    %13 = vector.load %arg5[%c0_5, %c0_6] : memref<128x128xf32, #tpu.memory_space<vmem>>, vector<128x128xf32>
    tpu.vector_store %arg5[%c0_5, %c0_6], %12 {strides = array<i32>} : memref<128x128xf32, #tpu.memory_space<vmem>>, vector<128x128xf32>,
    %c0_i32_7 = arith.constant 0 : i32
    %14 = arith.cmpi eq, %arg1, %c0_i32_7 : i32
    %15 = arith.extui %14 : i1 to i32
    %c0_i32_8 = arith.constant 0 : i32
    %16 = arith.cmpi ne, %15, %c0_i32_8 : i32
    scf.if %16 {
      %c0_9 = arith.constant 0 : index
      %c0_10 = arith.constant 0 : index
      %17 = vector.load %arg5[%c0_9, %c0_10] : memref<128x128xf32, #tpu.memory_space<vmem>>, vector<128x128xf32>
      %18 = tpu.iota {dimensions = array<i32: 1>} : vector<128x128xi32>
      %c8_i32 = arith.constant 8 : i32
      %19 = vector.broadcast %c8_i32 : i32 to vector<128x128xi32>
      %20 = arith.cmpi slt, %18, %19 : vector<128x128xi32>
      %cst_11 = arith.constant -1.000000e+30 : f32
      %21 = vector.broadcast %cst_11 : f32 to vector<128x128xf32>
      %22 = arith.select %20, %17, %21 : vector<128x128xi1>, vector<128x128xf32>
      %cst_12 = arith.constant dense<0xFF800000> : vector<128xf32>
      %23 = vector.multi_reduction <maximumf>, %22, %cst_12 [1] : vector<128x128xf32> to vector<128xf32>
      %24 = vector.shape_cast %23 : vector<128xf32> to vector<128x1xf32>
      %25 = vector.broadcast %24 : vector<128x1xf32> to vector<128x128xf32>
      %26 = arith.subf %22, %25 : vector<128x128xf32>
      %27 = math.exp %26 : vector<128x128xf32>
      %cst_13 = arith.constant dense<0.000000e+00> : vector<128xf32>
      %28 = vector.multi_reduction <add>, %27, %cst_13 [1] : vector<128x128xf32> to vector<128xf32>
      %29 = vector.shape_cast %28 : vector<128xf32> to vector<128x1xf32>
      %30 = math.log %29 : vector<128x1xf32>
      %31 = vector.broadcast %30 : vector<128x1xf32> to vector<128x128xf32>
      %32 = arith.subf %26, %31 : vector<128x128xf32>
      %c0_14 = arith.constant 0 : index
      %c0_15 = arith.constant 0 : index
      %33 = vector.load %arg4[%c0_14, %c0_15] : memref<128x128xf32, #tpu.memory_space<vmem>>, vector<128x128xf32>
      tpu.vector_store %arg4[%c0_14, %c0_15], %32 {strides = array<i32>} : memref<128x128xf32, #tpu.memory_space<vmem>>, vector<128x128xf32>,
    } else {
    }
    return
  }
  func.func @transform_0(%arg0: i32, %arg1: i32) -> (i32, i32) {
    %c0_i32 = arith.constant 0 : i32
    return %arg0, %arg1 : i32, i32
  }
  func.func @transform_1(%arg0: i32, %arg1: i32) -> (i32, i32) {
    %c0_i32 = arith.constant 0 : i32
    %c0_i32_0 = arith.constant 0 : i32
    %c0_i32_1 = arith.constant 0 : i32
    return %c0_i32, %c0_i32_0 : i32, i32
  }
  func.func @transform_2(%arg0: i32, %arg1: i32) -> (i32, i32) {
    %c0_i32 = arith.constant 0 : i32
    %c0_i32_0 = arith.constant 0 : i32
    return %arg0, %c0_i32 : i32, i32
  }
}

module attributes {stable_mosaic.version = 11 : i64} {
  func.func @_layer1_kernel(%arg0: i32, %arg1: i32, %arg2: memref<128x128xi8, #tpu.memory_space<vmem>>, %arg3: memref<128x128xbf16, #tpu.memory_space<vmem>>, %arg4: memref<128x128xbf16, #tpu.memory_space<vmem>>, %arg5: memref<128x128xbf16, #tpu.memory_space<vmem>>, %arg6: memref<128x128xf32, #tpu.memory_space<vmem>>) attributes {dimension_semantics = [#tpu.dimension_semantics<parallel>, #tpu.dimension_semantics<arbitrary>], iteration_bounds = array<i64: 1, 1>, scalar_prefetch = 0 : i64, scratch_operands = 1 : i64, tpu.core_type = #tpu.core_type<tc>, window_params = [{transform_indices = @transform_0, window_bounds = array<i64: 128, 128>}, {pipeline_mode = #tpu.pipeline_mode<synchronous>, transform_indices = @transform_1, window_bounds = array<i64: 128, 128>}, {pipeline_mode = #tpu.pipeline_mode<synchronous>, transform_indices = @transform_2, window_bounds = array<i64: 128, 128>}, {transform_indices = @transform_3, window_bounds = array<i64: 128, 128>}]} {
    %c0_i32 = arith.constant 0 : i32
    %0 = arith.cmpi eq, %arg1, %c0_i32 : i32
    %1 = arith.extui %0 : i1 to i32
    %c0_i32_0 = arith.constant 0 : i32
    %2 = arith.cmpi ne, %1, %c0_i32_0 : i32
    scf.if %2 {
      %cst_9 = arith.constant 0.000000e+00 : f32
      %17 = vector.broadcast %cst_9 : f32 to vector<128x128xf32>
      %c0_10 = arith.constant 0 : index
      %c0_11 = arith.constant 0 : index
      %18 = vector.load %arg6[%c0_10, %c0_11] : memref<128x128xf32, #tpu.memory_space<vmem>>, vector<128x128xf32>
      tpu.vector_store %arg6[%c0_10, %c0_11], %17 {strides = array<i32>} : memref<128x128xf32, #tpu.memory_space<vmem>>, vector<128x128xf32>,
    } else {
    }
    %c0 = arith.constant 0 : index
    %c0_1 = arith.constant 0 : index
    %3 = vector.load %arg2[%c0, %c0_1] : memref<128x128xi8, #tpu.memory_space<vmem>>, vector<128x128xi8>
    %4 = arith.sitofp %3 : vector<128x128xi8> to vector<128x128xf32>
    %5 = arith.truncf %4 : vector<128x128xf32> to vector<128x128xbf16>
    %c128_i32 = arith.constant 128 : i32
    %6 = arith.muli %arg1, %c128_i32 : i32
    %7 = tpu.assume_multiple %6, 128 : i32
    %8 = arith.index_cast %7 : i32 to index
    %c0_2 = arith.constant 0 : index
    %9 = vector.load %arg3[%8, %c0_2] : memref<128x128xbf16, #tpu.memory_space<vmem>>, vector<128x128xbf16>
    %c0_3 = arith.constant 0 : index
    %c0_4 = arith.constant 0 : index
    %10 = vector.load %arg6[%c0_3, %c0_4] : memref<128x128xf32, #tpu.memory_space<vmem>>, vector<128x128xf32>
    %cst = arith.constant dense<0.000000e+00> : vector<128x128xf32>
    %11 = tpu.matmul %5, %9, %cst {dimension_numbers = #tpu.dot_dimension_numbers<[1], [0], [0], [1], [0, 0, 1, 1], [], []>} : vector<128x128xbf16>, vector<128x128xbf16>, vector<128x128xf32> -> vector<128x128xf32>
    %12 = arith.addf %10, %11 : vector<128x128xf32>
    %c0_5 = arith.constant 0 : index
    %c0_6 = arith.constant 0 : index
    %13 = vector.load %arg6[%c0_5, %c0_6] : memref<128x128xf32, #tpu.memory_space<vmem>>, vector<128x128xf32>
    tpu.vector_store %arg6[%c0_5, %c0_6], %12 {strides = array<i32>} : memref<128x128xf32, #tpu.memory_space<vmem>>, vector<128x128xf32>,
    %c0_i32_7 = arith.constant 0 : i32
    %14 = arith.cmpi eq, %arg1, %c0_i32_7 : i32
    %15 = arith.extui %14 : i1 to i32
    %c0_i32_8 = arith.constant 0 : i32
    %16 = arith.cmpi ne, %15, %c0_i32_8 : i32
    scf.if %16 {
      %c0_9 = arith.constant 0 : index
      %c0_10 = arith.constant 0 : index
      %17 = vector.load %arg6[%c0_9, %c0_10] : memref<128x128xf32, #tpu.memory_space<vmem>>, vector<128x128xf32>
      %cst_11 = arith.constant 0.000000e+00 : f32
      %18 = vector.broadcast %cst_11 : f32 to vector<128x128xf32>
      %19 = arith.maximumf %17, %18 : vector<128x128xf32>
      %20 = arith.truncf %19 : vector<128x128xf32> to vector<128x128xbf16>
      %c0_12 = arith.constant 0 : index
      %c0_13 = arith.constant 0 : index
      %21 = vector.load %arg4[%c0_12, %c0_13] : memref<128x128xbf16, #tpu.memory_space<vmem>>, vector<128x128xbf16>
      %cst_14 = arith.constant dense<0.000000e+00> : vector<128x128xf32>
      %22 = tpu.matmul %20, %21, %cst_14 {dimension_numbers = #tpu.dot_dimension_numbers<[1], [0], [0], [1], [0, 0, 1, 1], [], []>} : vector<128x128xbf16>, vector<128x128xbf16>, vector<128x128xf32> -> vector<128x128xf32>
      %23 = arith.truncf %22 : vector<128x128xf32> to vector<128x128xbf16>
      %c0_15 = arith.constant 0 : index
      %c0_16 = arith.constant 0 : index
      %24 = vector.load %arg5[%c0_15, %c0_16] : memref<128x128xbf16, #tpu.memory_space<vmem>>, vector<128x128xbf16>
      tpu.vector_store %arg5[%c0_15, %c0_16], %23 {strides = array<i32>} : memref<128x128xbf16, #tpu.memory_space<vmem>>, vector<128x128xbf16>,
    } else {
    }
    return
  }
  func.func @transform_0(%arg0: i32, %arg1: i32) -> (i32, i32) {
    %c0_i32 = arith.constant 0 : i32
    return %arg0, %arg1 : i32, i32
  }
  func.func @transform_1(%arg0: i32, %arg1: i32) -> (i32, i32) {
    %c0_i32 = arith.constant 0 : i32
    %c0_i32_0 = arith.constant 0 : i32
    %c0_i32_1 = arith.constant 0 : i32
    return %c0_i32, %c0_i32_0 : i32, i32
  }
  func.func @transform_2(%arg0: i32, %arg1: i32) -> (i32, i32) {
    %c0_i32 = arith.constant 0 : i32
    %c0_i32_0 = arith.constant 0 : i32
    %c0_i32_1 = arith.constant 0 : i32
    return %c0_i32, %c0_i32_0 : i32, i32
  }
  func.func @transform_3(%arg0: i32, %arg1: i32) -> (i32, i32) {
    %c0_i32 = arith.constant 0 : i32
    %c0_i32_0 = arith.constant 0 : i32
    return %arg0, %c0_i32 : i32, i32
  }
}

</mosaic_0001>

<llo_original>
// kernel: gcn_forward_pallas.3
$region0: #{gcn_forward_pallas.3}
  #allocation0 [shape = 'u32[]', space=smem, size = 0x4, offset = 0x4, fixed_abs, tag = 'smem constant byte address 0x4 - core index']
  #allocation1 [shape = 'u32[144,128]{1,0:T(1,128)}', space=vmem, size = 0x12000, scoped, tag = 'internal scratch']
  #allocation2 [shape = 'f32[128,128]{1,0:T(8,128)}', space=vmem, size = 0x10000, scoped, tag = 'scratch operand']
  %s0 = inlined_call_operand.vmem [shape: s8[128,128], index: 0, kind: input, shape index: {}]
  %s1 = inlined_call_operand.vmem [shape: bf16[128,128], index: 1, kind: input, shape index: {}]
  %s2 = inlined_call_operand.vmem [shape: f32[128,128], index: 2, kind: output, shape index: {}]
  %s3 = sld [smem:[#allocation0]]
  $region26: #{gcn_forward_pallas.3} parent=0
    _
  %s5 = ssub.s32 1, %s3
  %s6 = scalar_select 0, %s5, %s3
  // Predicated region
  $region2: #{gcn_forward_pallas.3} parent=0 // pred_check
    _
  $region3: #{gcn_forward_pallas.3} parent=0 // pred_check_branch
    %8 = sbr.rel (0) target = $region5
  $region4: #{gcn_forward_pallas.3} parent=0 // pred_region
    _
  $region5: #{gcn_forward_pallas.3} parent=0 // pred_fallthru
    _
  // Predicated region
  $region6: #{gcn_forward_pallas.3} parent=0 // pred_check
    _
  $region7: #{gcn_forward_pallas.3} parent=0 // pred_check_branch
    %10 = sbr.rel (0) target = $region9
  $region8: #{gcn_forward_pallas.3} parent=0 // pred_region
    _
  $region9: #{gcn_forward_pallas.3} parent=0 // pred_fallthru
    _
  %p12 = scmp.eq.s32.totalorder 0, 0
  // Predicated region
  $region10: #{gcn_forward_pallas.3} parent=0 // pred_check
    %p13 = pneg %p12
  $region11: #{gcn_forward_pallas.3} parent=0 // pred_check_branch
    %15 = sbr.rel (%p13) target = $region13
  $region12: #{gcn_forward_pallas.3} parent=0 // pred_region
    %16 = vst [vmem:[#allocation2] sm:$0xff] 0.0
    %17 = vst [vmem:[#allocation2 + $0x8] sm:$0xff] 0.0
    %18 = vst [vmem:[#allocation2 + $0x10] sm:$0xff] 0.0
    %19 = vst [vmem:[#allocation2 + $0x18] sm:$0xff] 0.0
    %20 = vst [vmem:[#allocation2 + $0x20] sm:$0xff] 0.0
    %21 = vst [vmem:[#allocation2 + $0x28] sm:$0xff] 0.0
    %22 = vst [vmem:[#allocation2 + $0x30] sm:$0xff] 0.0
    %23 = vst [vmem:[#allocation2 + $0x38] sm:$0xff] 0.0
    %24 = vst [vmem:[#allocation2 + $0x40] sm:$0xff] 0.0
    %25 = vst [vmem:[#allocation2 + $0x48] sm:$0xff] 0.0
    %26 = vst [vmem:[#allocation2 + $0x50] sm:$0xff] 0.0
    %27 = vst [vmem:[#allocation2 + $0x58] sm:$0xff] 0.0
    %28 = vst [vmem:[#allocation2 + $0x60] sm:$0xff] 0.0
    %29 = vst [vmem:[#allocation2 + $0x68] sm:$0xff] 0.0
    %30 = vst [vmem:[#allocation2 + $0x70] sm:$0xff] 0.0
    %31 = vst [vmem:[#allocation2 + $0x78] sm:$0xff] 0.0
  $region13: #{gcn_forward_pallas.3} parent=0 // pred_fallthru
    _
  %v32 = vld [vmem:[%s0] sm:$0xff]
  %v33 = vld [vmem:[%s0 + $0x8] sm:$0xff]
  %v34 = vld [vmem:[%s0 + $0x10] sm:$0xff]
  %v35 = vld [vmem:[%s0 + $0x18] sm:$0xff]
  %v36 = vunpack.c.l.s8.bf16 %v32
  %v37 = vunpack.c.h.s8.bf16 %v32
  %v38 = vunpack.c.l.s8.bf16 %v33
  %v39 = vunpack.c.h.s8.bf16 %v33
  %v40 = vunpack.c.l.s8.bf16 %v34
  %v41 = vunpack.c.h.s8.bf16 %v34
  %v42 = vunpack.c.l.s8.bf16 %v35
  %v43 = vunpack.c.h.s8.bf16 %v35
  %s44 = smul.u32 0, 128
  %s45 = sshra.s32 %s44, 3
  %s46 = sand.u32 %s44, 7
  %s47 = smul.addr %s45, 4
  %s48 = scalar_lea.vmem %s1, %s47
  %v49 = vld [vmem:[%s48] sm:$0xf]
  %v50 = vld [vmem:[%s48 + $0x4] sm:$0xf]
  %v51 = vld [vmem:[%s48 + $0x8] sm:$0xf]
  %v52 = vld [vmem:[%s48 + $0xc] sm:$0xf]
  %v53 = vld [vmem:[%s48 + $0x10] sm:$0xf]
  %v54 = vld [vmem:[%s48 + $0x14] sm:$0xf]
  %v55 = vld [vmem:[%s48 + $0x18] sm:$0xf]
  %v56 = vld [vmem:[%s48 + $0x1c] sm:$0xf]
  %v57 = vld [vmem:[%s48 + $0x20] sm:$0xf]
  %v58 = vld [vmem:[%s48 + $0x24] sm:$0xf]
  %v59 = vld [vmem:[%s48 + $0x28] sm:$0xf]
  %v60 = vld [vmem:[%s48 + $0x2c] sm:$0xf]
  %v61 = vld [vmem:[%s48 + $0x30] sm:$0xf]
  %v62 = vld [vmem:[%s48 + $0x34] sm:$0xf]
  %v63 = vld [vmem:[%s48 + $0x38] sm:$0xf]
  %v64 = vld [vmem:[%s48 + $0x3c] sm:$0xf]
  %v65 = vld [vmem:[#allocation2] sm:$0xff]
  %v66 = vld [vmem:[#allocation2 + $0x8] sm:$0xff]
  %v67 = vld [vmem:[#allocation2 + $0x10] sm:$0xff]
  %v68 = vld [vmem:[#allocation2 + $0x18] sm:$0xff]
  %v69 = vld [vmem:[#allocation2 + $0x20] sm:$0xff]
  %v70 = vld [vmem:[#allocation2 + $0x28] sm:$0xff]
  %v71 = vld [vmem:[#allocation2 + $0x30] sm:$0xff]
  %v72 = vld [vmem:[#allocation2 + $0x38] sm:$0xff]
  %v73 = vld [vmem:[#allocation2 + $0x40] sm:$0xff]
  %v74 = vld [vmem:[#allocation2 + $0x48] sm:$0xff]
  %v75 = vld [vmem:[#allocation2 + $0x50] sm:$0xff]
  %v76 = vld [vmem:[#allocation2 + $0x58] sm:$0xff]
  %v77 = vld [vmem:[#allocation2 + $0x60] sm:$0xff]
  %v78 = vld [vmem:[#allocation2 + $0x68] sm:$0xff]
  %v79 = vld [vmem:[#allocation2 + $0x70] sm:$0xff]
  %v80 = vld [vmem:[#allocation2 + $0x78] sm:$0xff]
  %v97 = vunpack.c.l.b16 %v49
  %v98 = vunpack.c.l.b16 %v50
  %v99 = vunpack.c.l.b16 %v51
  %v100 = vunpack.c.l.b16 %v52
  %v101 = vunpack.c.l.b16 %v53
  %v102 = vunpack.c.l.b16 %v54
  %v103 = vunpack.c.l.b16 %v55
  %v104 = vunpack.c.l.b16 %v56
  %v105 = vunpack.c.l.b16 %v57
  %v106 = vunpack.c.l.b16 %v58
  %v107 = vunpack.c.l.b16 %v59
  %v108 = vunpack.c.l.b16 %v60
  %v109 = vunpack.c.l.b16 %v61
  %v110 = vunpack.c.l.b16 %v62
  %v111 = vunpack.c.l.b16 %v63
  %v112 = vunpack.c.l.b16 %v64
  %v113 = vpack.c.b16 %v98, %v97
  %v114 = vpack.c.b16 %v100, %v99
  %v115 = vpack.c.b16 %v102, %v101
  %v116 = vpack.c.b16 %v104, %v103
  %v117 = vpack.c.b16 %v106, %v105
  %v118 = vpack.c.b16 %v108, %v107
  %v119 = vpack.c.b16 %v110, %v109
  %v120 = vpack.c.b16 %v112, %v111
  %129 = vmatprep.subr.bf16.mxu0 0
  %130 = vmatpush1.bf16.msra.mxu0 %v113
  %131 = vmatprep.subr.bf16.mxu0 0
  %132 = vmatpush1.bf16.msra.mxu0 %v114
  %133 = vmatprep.subr.bf16.mxu0 0
  %134 = vmatpush1.bf16.msra.mxu0 %v115
  %135 = vmatprep.subr.bf16.mxu0 0
  %136 = vmatpush1.bf16.msra.mxu0 %v116
  %137 = vmatprep.subr.bf16.mxu0 0
  %138 = vmatpush1.bf16.msra.mxu0 %v117
  %139 = vmatprep.subr.bf16.mxu0 0
  %140 = vmatpush1.bf16.msra.mxu0 %v118
  %141 = vmatprep.subr.bf16.mxu0 0
  %142 = vmatpush1.bf16.msra.mxu0 %v119
  %143 = vmatprep.subr.bf16.mxu0 0
  %144 = vmatpush1.bf16.msra.mxu0 %v120
  %145 = vmatprep.subr.bf16.mxu0 0
  %146 = vmatpush1.bf16.msra.mxu0 0
  %147 = vmatprep.subr.bf16.mxu0 0
  %148 = vmatpush1.bf16.msra.mxu0 0
  %149 = vmatprep.subr.bf16.mxu0 0
  %150 = vmatpush1.bf16.msra.mxu0 0
  %151 = vmatprep.subr.bf16.mxu0 0
  %152 = vmatpush1.bf16.msra.mxu0 0
  %153 = vmatprep.subr.bf16.mxu0 0
  %154 = vmatpush1.bf16.msra.mxu0 0
  %155 = vmatprep.subr.bf16.mxu0 0
  %156 = vmatpush1.bf16.msra.mxu0 0
  %157 = vmatprep.subr.bf16.mxu0 0
  %158 = vmatpush1.bf16.msra.mxu0 0
  %159 = vmatprep.subr.bf16.mxu0 0
  %160 = vmatpush1.bf16.msra.mxu0 0
  %161 = vmatprep.mubr.bf16.mxu0 0
  %162 = vmatmul.mubr.bf16.gmra.mrb[0].mxu0 %v36
  %v163 = vpop.f32.mrb[0].mxu0
  %v164 = vadd.f32 0.0, %v163
  %v165 = vpop.f32.mrb[0].mxu0
  %v166 = vpop.f32.mrb[0].mxu0
  %v167 = vadd.f32 0.0, %v166
  %v168 = vpop.f32.mrb[0].mxu0
  %169 = vmatprep.mubr.bf16.mxu0 0
  %170 = vmatmul.mubr.bf16.gmra.mrb[0].mxu0 %v37
  %v171 = vpop.f32.mrb[0].mxu0
  %v172 = vadd.f32 0.0, %v171
  %v173 = vpop.f32.mrb[0].mxu0
  %v174 = vpop.f32.mrb[0].mxu0
  %v175 = vadd.f32 0.0, %v174
  %v176 = vpop.f32.mrb[0].mxu0
  %177 = vmatprep.mubr.bf16.mxu0 0
  %178 = vmatmul.mubr.bf16.gmra.mrb[0].mxu0 %v38
  %v179 = vpop.f32.mrb[0].mxu0
  %v180 = vadd.f32 0.0, %v179
  %v181 = vpop.f32.mrb[0].mxu0
  %v182 = vpop.f32.mrb[0].mxu0
  %v183 = vadd.f32 0.0, %v182
  %v184 = vpop.f32.mrb[0].mxu0
  %185 = vmatprep.mubr.bf16.mxu0 0
  %186 = vmatmul.mubr.bf16.gmra.mrb[0].mxu0 %v39
  %v187 = vpop.f32.mrb[0].mxu0
  %v188 = vadd.f32 0.0, %v187
  %v189 = vpop.f32.mrb[0].mxu0
  %v190 = vpop.f32.mrb[0].mxu0
  %v191 = vadd.f32 0.0, %v190
  %v192 = vpop.f32.mrb[0].mxu0
  %193 = vmatprep.mubr.bf16.mxu0 0
  %194 = vmatmul.mubr.bf16.gmra.mrb[0].mxu0 %v40
  %v195 = vpop.f32.mrb[0].mxu0
  %v196 = vadd.f32 0.0, %v195
  %v197 = vpop.f32.mrb[0].mxu0
  %v198 = vpop.f32.mrb[0].mxu0
  %v199 = vadd.f32 0.0, %v198
  %v200 = vpop.f32.mrb[0].mxu0
  %201 = vmatprep.mubr.bf16.mxu0 0
  %202 = vmatmul.mubr.bf16.gmra.mrb[0].mxu0 %v41
  %v203 = vpop.f32.mrb[0].mxu0
  %v204 = vadd.f32 0.0, %v203
  %v205 = vpop.f32.mrb[0].mxu0
  %v206 = vpop.f32.mrb[0].mxu0
  %v207 = vadd.f32 0.0, %v206
  %v208 = vpop.f32.mrb[0].mxu0
  %209 = vmatprep.mubr.bf16.mxu0 0
  %210 = vmatmul.mubr.bf16.gmra.mrb[0].mxu0 %v42
  %v211 = vpop.f32.mrb[0].mxu0
  %v212 = vadd.f32 0.0, %v211
  %v213 = vpop.f32.mrb[0].mxu0
  %v214 = vpop.f32.mrb[0].mxu0
  %v215 = vadd.f32 0.0, %v214
  %v216 = vpop.f32.mrb[0].mxu0
  %217 = vmatprep.mubr.bf16.mxu0 0
  %218 = vmatmul.mubr.bf16.gmra.mrb[0].mxu0 %v43
  %v219 = vpop.f32.mrb[0].mxu0
  %v220 = vadd.f32 0.0, %v219
  %v221 = vpop.f32.mrb[0].mxu0
  %v222 = vpop.f32.mrb[0].mxu0
  %v223 = vadd.f32 0.0, %v222
  %v224 = vpop.f32.mrb[0].mxu0
  %225 = vdwg.mxu0
  %v226 = vadd.f32 %v65, %v164
  %v227 = vadd.f32 %v66, %v167
  %v228 = vadd.f32 %v67, %v172
  %v229 = vadd.f32 %v68, %v175
  %v230 = vadd.f32 %v69, %v180
  %v231 = vadd.f32 %v70, %v183
  %v232 = vadd.f32 %v71, %v188
  %v233 = vadd.f32 %v72, %v191
  %v234 = vadd.f32 %v73, %v196
  %v235 = vadd.f32 %v74, %v199
  %v236 = vadd.f32 %v75, %v204
  %v237 = vadd.f32 %v76, %v207
  %v238 = vadd.f32 %v77, %v212
  %v239 = vadd.f32 %v78, %v215
  %v240 = vadd.f32 %v79, %v220
  %v241 = vadd.f32 %v80, %v223
  %242 = vst [vmem:[#allocation2] sm:$0xff] %v226
  %243 = vst [vmem:[#allocation2 + $0x8] sm:$0xff] %v227
  %244 = vst [vmem:[#allocation2 + $0x10] sm:$0xff] %v228
  %245 = vst [vmem:[#allocation2 + $0x18] sm:$0xff] %v229
  %246 = vst [vmem:[#allocation2 + $0x20] sm:$0xff] %v230
  %247 = vst [vmem:[#allocation2 + $0x28] sm:$0xff] %v231
  %248 = vst [vmem:[#allocation2 + $0x30] sm:$0xff] %v232
  %249 = vst [vmem:[#allocation2 + $0x38] sm:$0xff] %v233
  %250 = vst [vmem:[#allocation2 + $0x40] sm:$0xff] %v234
  %251 = vst [vmem:[#allocation2 + $0x48] sm:$0xff] %v235
  %252 = vst [vmem:[#allocation2 + $0x50] sm:$0xff] %v236
  %253 = vst [vmem:[#allocation2 + $0x58] sm:$0xff] %v237
  %254 = vst [vmem:[#allocation2 + $0x60] sm:$0xff] %v238
  %255 = vst [vmem:[#allocation2 + $0x68] sm:$0xff] %v239
  %256 = vst [vmem:[#allocation2 + $0x70] sm:$0xff] %v240
  %257 = vst [vmem:[#allocation2 + $0x78] sm:$0xff] %v241
  // Predicated region
  $region14: #{gcn_forward_pallas.3} parent=0 // pred_check
    %p258 = pneg %p12
  $region15: #{gcn_forward_pallas.3} parent=0 // pred_check_branch
    %260 = sbr.rel (%p258) target = $region17
  $region16: #{gcn_forward_pallas.3} parent=0 // pred_region
    %v261 = vld [vmem:[#allocation2] sm:$0xff]
    %v262 = vld [vmem:[#allocation2 + $0x8] sm:$0xff]
    %v263 = vld [vmem:[#allocation2 + $0x10] sm:$0xff]
    %v264 = vld [vmem:[#allocation2 + $0x18] sm:$0xff]
    %v265 = vld [vmem:[#allocation2 + $0x20] sm:$0xff]
    %v266 = vld [vmem:[#allocation2 + $0x28] sm:$0xff]
    %v267 = vld [vmem:[#allocation2 + $0x30] sm:$0xff]
    %v268 = vld [vmem:[#allocation2 + $0x38] sm:$0xff]
    %v269 = vld [vmem:[#allocation2 + $0x40] sm:$0xff]
    %v270 = vld [vmem:[#allocation2 + $0x48] sm:$0xff]
    %v271 = vld [vmem:[#allocation2 + $0x50] sm:$0xff]
    %v272 = vld [vmem:[#allocation2 + $0x58] sm:$0xff]
    %v273 = vld [vmem:[#allocation2 + $0x60] sm:$0xff]
    %v274 = vld [vmem:[#allocation2 + $0x68] sm:$0xff]
    %v275 = vld [vmem:[#allocation2 + $0x70] sm:$0xff]
    %v276 = vld [vmem:[#allocation2 + $0x78] sm:$0xff]
    %v277 = vlaneseq
    %v278 = vand.u32 %v277, 127
    %vm279 = vcmp.lt.s32.totalorder %v278, 8
    %v280 = vsel %vm279, %v261, -1e+30
    %v281 = vsel %vm279, %v262, -1e+30
    %v282 = vsel %vm279, %v263, -1e+30
    %v283 = vsel %vm279, %v264, -1e+30
    %v284 = vsel %vm279, %v265, -1e+30
    %v285 = vsel %vm279, %v266, -1e+30
    %v286 = vsel %vm279, %v267, -1e+30
    %v287 = vsel %vm279, %v268, -1e+30
    %v288 = vsel %vm279, %v269, -1e+30
    %v289 = vsel %vm279, %v270, -1e+30
    %v290 = vsel %vm279, %v271, -1e+30
    %v291 = vsel %vm279, %v272, -1e+30
    %v292 = vsel %vm279, %v273, -1e+30
    %v293 = vsel %vm279, %v274, -1e+30
    %v294 = vsel %vm279, %v275, -1e+30
    %v295 = vsel %vm279, %v276, -1e+30
    %296 = vmax.xlane.f32.xlu0 %v280
    %v297 = vpop.xlane.xlu0 %296
    %298 = vmax.xlane.f32.xlu0 %v281
    %v299 = vpop.xlane.xlu0 %298
    %300 = vmax.xlane.f32.xlu0 %v282
    %v301 = vpop.xlane.xlu0 %300
    %302 = vmax.xlane.f32.xlu0 %v283
    %v303 = vpop.xlane.xlu0 %302
    %304 = vmax.xlane.f32.xlu0 %v284
    %v305 = vpop.xlane.xlu0 %304
    %306 = vmax.xlane.f32.xlu0 %v285
    %v307 = vpop.xlane.xlu0 %306
    %308 = vmax.xlane.f32.xlu0 %v286
    %v309 = vpop.xlane.xlu0 %308
    %310 = vmax.xlane.f32.xlu0 %v287
    %v311 = vpop.xlane.xlu0 %310
    %312 = vmax.xlane.f32.xlu0 %v288
    %v313 = vpop.xlane.xlu0 %312
    %314 = vmax.xlane.f32.xlu0 %v289
    %v315 = vpop.xlane.xlu0 %314
    %316 = vmax.xlane.f32.xlu0 %v290
    %v317 = vpop.xlane.xlu0 %316
    %318 = vmax.xlane.f32.xlu0 %v291
    %v319 = vpop.xlane.xlu0 %318
    %320 = vmax.xlane.f32.xlu0 %v292
    %v321 = vpop.xlane.xlu0 %320
    %322 = vmax.xlane.f32.xlu0 %v293
    %v323 = vpop.xlane.xlu0 %322
    %324 = vmax.xlane.f32.xlu0 %v294
    %v325 = vpop.xlane.xlu0 %324
    %326 = vmax.xlane.f32.xlu0 %v295
    %v327 = vpop.xlane.xlu0 %326
    %v328 = vsub.f32 %v280, %v297
    %v329 = vsub.f32 %v281, %v299
    %v330 = vsub.f32 %v282, %v301
    %v331 = vsub.f32 %v283, %v303
    %v332 = vsub.f32 %v284, %v305
    %v333 = vsub.f32 %v285, %v307
    %v334 = vsub.f32 %v286, %v309
    %v335 = vsub.f32 %v287, %v311
    %v336 = vsub.f32 %v288, %v313
    %v337 = vsub.f32 %v289, %v315
    %v338 = vsub.f32 %v290, %v317
    %v339 = vsub.f32 %v291, %v319
    %v340 = vsub.f32 %v292, %v321
    %v341 = vsub.f32 %v293, %v323
    %v342 = vsub.f32 %v294, %v325
    %v343 = vsub.f32 %v295, %v327
    %v344 = vmul.f32 %v328, 1.442695
    %v345 = vpow.pop %v344
    %v346 = vmul.f32 %v329, 1.442695
    %v347 = vpow.pop %v346
    %v348 = vmul.f32 %v330, 1.442695
    %v349 = vpow.pop %v348
    %v350 = vmul.f32 %v331, 1.442695
    %v351 = vpow.pop %v350
    %v352 = vmul.f32 %v332, 1.442695
    %v353 = vpow.pop %v352
    %v354 = vmul.f32 %v333, 1.442695
    %v355 = vpow.pop %v354
    %v356 = vmul.f32 %v334, 1.442695
    %v357 = vpow.pop %v356
    %v358 = vmul.f32 %v335, 1.442695
    %v359 = vpow.pop %v358
    %v360 = vmul.f32 %v336, 1.442695
    %v361 = vpow.pop %v360
    %v362 = vmul.f32 %v337, 1.442695
    %v363 = vpow.pop %v362
    %v364 = vmul.f32 %v338, 1.442695
    %v365 = vpow.pop %v364
    %v366 = vmul.f32 %v339, 1.442695
    %v367 = vpow.pop %v366
    %v368 = vmul.f32 %v340, 1.442695
    %v369 = vpow.pop %v368
    %v370 = vmul.f32 %v341, 1.442695
    %v371 = vpow.pop %v370
    %v372 = vmul.f32 %v342, 1.442695
    %v373 = vpow.pop %v372
    %v374 = vmul.f32 %v343, 1.442695
    %v375 = vpow.pop %v374
    %376 = vadd.xlane.f32.xlu0 %v345
    %v377 = vpop.xlane.xlu0 %376
    %378 = vadd.xlane.f32.xlu0 %v347
    %v379 = vpop.xlane.xlu0 %378
    %380 = vadd.xlane.f32.xlu0 %v349
    %v381 = vpop.xlane.xlu0 %380
    %382 = vadd.xlane.f32.xlu0 %v351
    %v383 = vpop.xlane.xlu0 %382
    %384 = vadd.xlane.f32.xlu0 %v353
    %v385 = vpop.xlane.xlu0 %384
    %386 = vadd.xlane.f32.xlu0 %v355
    %v387 = vpop.xlane.xlu0 %386
    %388 = vadd.xlane.f32.xlu0 %v357
    %v389 = vpop.xlane.xlu0 %388
    %390 = vadd.xlane.f32.xlu0 %v359
    %v391 = vpop.xlane.xlu0 %390
    %392 = vadd.xlane.f32.xlu0 %v361
    %v393 = vpop.xlane.xlu0 %392
    %394 = vadd.xlane.f32.xlu0 %v363
    %v395 = vpop.xlane.xlu0 %394
    %396 = vadd.xlane.f32.xlu0 %v365
    %v397 = vpop.xlane.xlu0 %396
    %398 = vadd.xlane.f32.xlu0 %v367
    %v399 = vpop.xlane.xlu0 %398
    %400 = vadd.xlane.f32.xlu0 %v369
    %v401 = vpop.xlane.xlu0 %400
    %402 = vadd.xlane.f32.xlu0 %v371
    %v403 = vpop.xlane.xlu0 %402
    %404 = vadd.xlane.f32.xlu0 %v373
    %v405 = vpop.xlane.xlu0 %404
    %406 = vadd.xlane.f32.xlu0 %v375
    %v407 = vpop.xlane.xlu0 %406
    %v408 = vlog2.pop %v377
    %v409 = vmul.f32 %v408, 0.6931472
    %v410 = vlog2.pop %v379
    %v411 = vmul.f32 %v410, 0.6931472
    %v412 = vlog2.pop %v381
    %v413 = vmul.f32 %v412, 0.6931472
    %v414 = vlog2.pop %v383
    %v415 = vmul.f32 %v414, 0.6931472
    %v416 = vlog2.pop %v385
    %v417 = vmul.f32 %v416, 0.6931472
    %v418 = vlog2.pop %v387
    %v419 = vmul.f32 %v418, 0.6931472
    %v420 = vlog2.pop %v389
    %v421 = vmul.f32 %v420, 0.6931472
    %v422 = vlog2.pop %v391
    %v423 = vmul.f32 %v422, 0.6931472
    %v424 = vlog2.pop %v393
    %v425 = vmul.f32 %v424, 0.6931472
    %v426 = vlog2.pop %v395
    %v427 = vmul.f32 %v426, 0.6931472
    %v428 = vlog2.pop %v397
    %v429 = vmul.f32 %v428, 0.6931472
    %v430 = vlog2.pop %v399
    %v431 = vmul.f32 %v430, 0.6931472
    %v432 = vlog2.pop %v401
    %v433 = vmul.f32 %v432, 0.6931472
    %v434 = vlog2.pop %v403
    %v435 = vmul.f32 %v434, 0.6931472
    %v436 = vlog2.pop %v405
    %v437 = vmul.f32 %v436, 0.6931472
    %v438 = vlog2.pop %v407
    %v439 = vmul.f32 %v438, 0.6931472
    %v440 = vsub.f32 %v328, %v409
    %v441 = vsub.f32 %v329, %v411
    %v442 = vsub.f32 %v330, %v413
    %v443 = vsub.f32 %v331, %v415
    %v444 = vsub.f32 %v332, %v417
    %v445 = vsub.f32 %v333, %v419
    %v446 = vsub.f32 %v334, %v421
    %v447 = vsub.f32 %v335, %v423
    %v448 = vsub.f32 %v336, %v425
    %v449 = vsub.f32 %v337, %v427
    %v450 = vsub.f32 %v338, %v429
    %v451 = vsub.f32 %v339, %v431
    %v452 = vsub.f32 %v340, %v433
    %v453 = vsub.f32 %v341, %v435
    %v454 = vsub.f32 %v342, %v437
    %v455 = vsub.f32 %v343, %v439
    %456 = vst [vmem:[%s2] sm:$0xff] %v440
    %457 = vst [vmem:[%s2 + $0x8] sm:$0xff] %v441
    %458 = vst [vmem:[%s2 + $0x10] sm:$0xff] %v442
    %459 = vst [vmem:[%s2 + $0x18] sm:$0xff] %v443
    %460 = vst [vmem:[%s2 + $0x20] sm:$0xff] %v444
    %461 = vst [vmem:[%s2 + $0x28] sm:$0xff] %v445
    %462 = vst [vmem:[%s2 + $0x30] sm:$0xff] %v446
    %463 = vst [vmem:[%s2 + $0x38] sm:$0xff] %v447
    %464 = vst [vmem:[%s2 + $0x40] sm:$0xff] %v448
    %465 = vst [vmem:[%s2 + $0x48] sm:$0xff] %v449
    %466 = vst [vmem:[%s2 + $0x50] sm:$0xff] %v450
    %467 = vst [vmem:[%s2 + $0x58] sm:$0xff] %v451
    %468 = vst [vmem:[%s2 + $0x60] sm:$0xff] %v452
    %469 = vst [vmem:[%s2 + $0x68] sm:$0xff] %v453
    %470 = vst [vmem:[%s2 + $0x70] sm:$0xff] %v454
    %471 = vst [vmem:[%s2 + $0x78] sm:$0xff] %v455
  $region17: #{gcn_forward_pallas.3} parent=0 // pred_fallthru
    _
  // Predicated region
  $region18: #{gcn_forward_pallas.3} parent=0 // pred_check
    _
  $region19: #{gcn_forward_pallas.3} parent=0 // pred_check_branch
    %473 = sbr.rel (0) target = $region21
  $region20: #{gcn_forward_pallas.3} parent=0 // pred_region
    _
  $region21: #{gcn_forward_pallas.3} parent=0 // pred_fallthru
    _
  // Predicated region
  $region22: #{gcn_forward_pallas.3} parent=0 // pred_check
    _
  $region23: #{gcn_forward_pallas.3} parent=0 // pred_check_branch
    %475 = sbr.rel (0) target = $region25
  $region24: #{gcn_forward_pallas.3} parent=0 // pred_region
    _
  $region25: #{gcn_forward_pallas.3} parent=0 // pred_fallthru
    _

// kernel: gcn_forward_pallas.2
$region0: #{gcn_forward_pallas.2}
  #allocation0 [shape = 'u32[]', space=smem, size = 0x4, offset = 0x4, fixed_abs, tag = 'smem constant byte address 0x4 - core index']
  #allocation1 [shape = 'u32[144,128]{1,0:T(1,128)}', space=vmem, size = 0x12000, scoped, tag = 'internal scratch']
  #allocation2 [shape = 'f32[128,128]{1,0:T(8,128)}', space=vmem, size = 0x10000, scoped, tag = 'scratch operand']
  %s0 = inlined_call_operand.vmem [shape: s8[128,128], index: 0, kind: input, shape index: {}]
  %s1 = inlined_call_operand.vmem [shape: bf16[128,128], index: 1, kind: input, shape index: {}]
  %s2 = inlined_call_operand.vmem [shape: bf16[128,128], index: 2, kind: input, shape index: {}]
  %s3 = inlined_call_operand.vmem [shape: bf16[128,128], index: 3, kind: output, shape index: {}]
  %s4 = sld [smem:[#allocation0]]
  $region30: #{gcn_forward_pallas.2} parent=0
    _
  %s6 = ssub.s32 1, %s4
  %s7 = scalar_select 0, %s6, %s4
  // Predicated region
  $region2: #{gcn_forward_pallas.2} parent=0 // pred_check
    _
  $region3: #{gcn_forward_pallas.2} parent=0 // pred_check_branch
    %9 = sbr.rel (0) target = $region5
  $region4: #{gcn_forward_pallas.2} parent=0 // pred_region
    _
  $region5: #{gcn_forward_pallas.2} parent=0 // pred_fallthru
    _
  // Predicated region
  $region6: #{gcn_forward_pallas.2} parent=0 // pred_check
    _
  $region7: #{gcn_forward_pallas.2} parent=0 // pred_check_branch
    %11 = sbr.rel (0) target = $region9
  $region8: #{gcn_forward_pallas.2} parent=0 // pred_region
    _
  $region9: #{gcn_forward_pallas.2} parent=0 // pred_fallthru
    _
  // Predicated region
  $region10: #{gcn_forward_pallas.2} parent=0 // pred_check
    _
  $region11: #{gcn_forward_pallas.2} parent=0 // pred_check_branch
    %13 = sbr.rel (0) target = $region13
  $region12: #{gcn_forward_pallas.2} parent=0 // pred_region
    _
  $region13: #{gcn_forward_pallas.2} parent=0 // pred_fallthru
    _
  %p15 = scmp.eq.s32.totalorder 0, 0
  // Predicated region
  $region14: #{gcn_forward_pallas.2} parent=0 // pred_check
    %p16 = pneg %p15
  $region15: #{gcn_forward_pallas.2} parent=0 // pred_check_branch
    %18 = sbr.rel (%p16) target = $region17
  $region16: #{gcn_forward_pallas.2} parent=0 // pred_region
    %19 = vst [vmem:[#allocation2] sm:$0xff] 0.0
    %20 = vst [vmem:[#allocation2 + $0x8] sm:$0xff] 0.0
    %21 = vst [vmem:[#allocation2 + $0x10] sm:$0xff] 0.0
    %22 = vst [vmem:[#allocation2 + $0x18] sm:$0xff] 0.0
    %23 = vst [vmem:[#allocation2 + $0x20] sm:$0xff] 0.0
    %24 = vst [vmem:[#allocation2 + $0x28] sm:$0xff] 0.0
    %25 = vst [vmem:[#allocation2 + $0x30] sm:$0xff] 0.0
    %26 = vst [vmem:[#allocation2 + $0x38] sm:$0xff] 0.0
    %27 = vst [vmem:[#allocation2 + $0x40] sm:$0xff] 0.0
    %28 = vst [vmem:[#allocation2 + $0x48] sm:$0xff] 0.0
    %29 = vst [vmem:[#allocation2 + $0x50] sm:$0xff] 0.0
    %30 = vst [vmem:[#allocation2 + $0x58] sm:$0xff] 0.0
    %31 = vst [vmem:[#allocation2 + $0x60] sm:$0xff] 0.0
    %32 = vst [vmem:[#allocation2 + $0x68] sm:$0xff] 0.0
    %33 = vst [vmem:[#allocation2 + $0x70] sm:$0xff] 0.0
    %34 = vst [vmem:[#allocation2 + $0x78] sm:$0xff] 0.0
  $region17: #{gcn_forward_pallas.2} parent=0 // pred_fallthru
    _
  %v35 = vld [vmem:[%s0] sm:$0xff]
  %v36 = vld [vmem:[%s0 + $0x8] sm:$0xff]
  %v37 = vld [vmem:[%s0 + $0x10] sm:$0xff]
  %v38 = vld [vmem:[%s0 + $0x18] sm:$0xff]
  %v39 = vunpack.c.l.s8.bf16 %v35
  %v40 = vunpack.c.h.s8.bf16 %v35
  %v41 = vunpack.c.l.s8.bf16 %v36
  %v42 = vunpack.c.h.s8.bf16 %v36
  %v43 = vunpack.c.l.s8.bf16 %v37
  %v44 = vunpack.c.h.s8.bf16 %v37
  %v45 = vunpack.c.l.s8.bf16 %v38
  %v46 = vunpack.c.h.s8.bf16 %v38
  %s47 = smul.u32 0, 128
  %s48 = sshra.s32 %s47, 3
  %s49 = sand.u32 %s47, 7
  %s50 = smul.addr %s48, 4
  %s51 = scalar_lea.vmem %s1, %s50
  %v52 = vld [vmem:[%s51] sm:$0xf]
  %v53 = vld [vmem:[%s51 + $0x4] sm:$0xf]
  %v54 = vld [vmem:[%s51 + $0x8] sm:$0xf]
  %v55 = vld [vmem:[%s51 + $0xc] sm:$0xf]
  %v56 = vld [vmem:[%s51 + $0x10] sm:$0xf]
  %v57 = vld [vmem:[%s51 + $0x14] sm:$0xf]
  %v58 = vld [vmem:[%s51 + $0x18] sm:$0xf]
  %v59 = vld [vmem:[%s51 + $0x1c] sm:$0xf]
  %v60 = vld [vmem:[%s51 + $0x20] sm:$0xf]
  %v61 = vld [vmem:[%s51 + $0x24] sm:$0xf]
  %v62 = vld [vmem:[%s51 + $0x28] sm:$0xf]
  %v63 = vld [vmem:[%s51 + $0x2c] sm:$0xf]
  %v64 = vld [vmem:[%s51 + $0x30] sm:$0xf]
  %v65 = vld [vmem:[%s51 + $0x34] sm:$0xf]
  %v66 = vld [vmem:[%s51 + $0x38] sm:$0xf]
  %v67 = vld [vmem:[%s51 + $0x3c] sm:$0xf]
  %v68 = vld [vmem:[#allocation2] sm:$0xff]
  %v69 = vld [vmem:[#allocation2 + $0x8] sm:$0xff]
  %v70 = vld [vmem:[#allocation2 + $0x10] sm:$0xff]
  %v71 = vld [vmem:[#allocation2 + $0x18] sm:$0xff]
  %v72 = vld [vmem:[#allocation2 + $0x20] sm:$0xff]
  %v73 = vld [vmem:[#allocation2 + $0x28] sm:$0xff]
  %v74 = vld [vmem:[#allocation2 + $0x30] sm:$0xff]
  %v75 = vld [vmem:[#allocation2 + $0x38] sm:$0xff]
  %v76 = vld [vmem:[#allocation2 + $0x40] sm:$0xff]
  %v77 = vld [vmem:[#allocation2 + $0x48] sm:$0xff]
  %v78 = vld [vmem:[#allocation2 + $0x50] sm:$0xff]
  %v79 = vld [vmem:[#allocation2 + $0x58] sm:$0xff]
  %v80 = vld [vmem:[#allocation2 + $0x60] sm:$0xff]
  %v81 = vld [vmem:[#allocation2 + $0x68] sm:$0xff]
  %v82 = vld [vmem:[#allocation2 + $0x70] sm:$0xff]
  %v83 = vld [vmem:[#allocation2 + $0x78] sm:$0xff]
  %v100 = vunpack.c.l.b16 %v52
  %v101 = vunpack.c.l.b16 %v53
  %v102 = vunpack.c.l.b16 %v54
  %v103 = vunpack.c.l.b16 %v55
  %v104 = vunpack.c.l.b16 %v56
  %v105 = vunpack.c.l.b16 %v57
  %v106 = vunpack.c.l.b16 %v58
  %v107 = vunpack.c.l.b16 %v59
  %v108 = vunpack.c.l.b16 %v60
  %v109 = vunpack.c.l.b16 %v61
  %v110 = vunpack.c.l.b16 %v62
  %v111 = vunpack.c.l.b16 %v63
  %v112 = vunpack.c.l.b16 %v64
  %v113 = vunpack.c.l.b16 %v65
  %v114 = vunpack.c.l.b16 %v66
  %v115 = vunpack.c.l.b16 %v67
  %v116 = vpack.c.b16 %v101, %v100
  %v117 = vpack.c.b16 %v103, %v102
  %v118 = vpack.c.b16 %v105, %v104
  %v119 = vpack.c.b16 %v107, %v106
  %v120 = vpack.c.b16 %v109, %v108
  %v121 = vpack.c.b16 %v111, %v110
  %v122 = vpack.c.b16 %v113, %v112
  %v123 = vpack.c.b16 %v115, %v114
  %132 = vmatprep.subr.bf16.mxu0 0
  %133 = vmatpush1.bf16.msra.mxu0 %v116
  %134 = vmatprep.subr.bf16.mxu0 0
  %135 = vmatpush1.bf16.msra.mxu0 %v117
  %136 = vmatprep.subr.bf16.mxu0 0
  %137 = vmatpush1.bf16.msra.mxu0 %v118
  %138 = vmatprep.subr.bf16.mxu0 0
  %139 = vmatpush1.bf16.msra.mxu0 %v119
  %140 = vmatprep.subr.bf16.mxu0 0
  %141 = vmatpush1.bf16.msra.mxu0 %v120
  %142 = vmatprep.subr.bf16.mxu0 0
  %143 = vmatpush1.bf16.msra.mxu0 %v121
  %144 = vmatprep.subr.bf16.mxu0 0
  %145 = vmatpush1.bf16.msra.mxu0 %v122
  %146 = vmatprep.subr.bf16.mxu0 0
  %147 = vmatpush1.bf16.msra.mxu0 %v123
  %148 = vmatprep.subr.bf16.mxu0 0
  %149 = vmatpush1.bf16.msra.mxu0 0
  %150 = vmatprep.subr.bf16.mxu0 0
  %151 = vmatpush1.bf16.msra.mxu0 0
  %152 = vmatprep.subr.bf16.mxu0 0
  %153 = vmatpush1.bf16.msra.mxu0 0
  %154 = vmatprep.subr.bf16.mxu0 0
  %155 = vmatpush1.bf16.msra.mxu0 0
  %156 = vmatprep.subr.bf16.mxu0 0
  %157 = vmatpush1.bf16.msra.mxu0 0
  %158 = vmatprep.subr.bf16.mxu0 0
  %159 = vmatpush1.bf16.msra.mxu0 0
  %160 = vmatprep.subr.bf16.mxu0 0
  %161 = vmatpush1.bf16.msra.mxu0 0
  %162 = vmatprep.subr.bf16.mxu0 0
  %163 = vmatpush1.bf16.msra.mxu0 0
  %164 = vmatprep.mubr.bf16.mxu0 0
  %165 = vmatmul.mubr.bf16.gmra.mrb[0].mxu0 %v39
  %v166 = vpop.f32.mrb[0].mxu0
  %v167 = vadd.f32 0.0, %v166
  %v168 = vpop.f32.mrb[0].mxu0
  %v169 = vpop.f32.mrb[0].mxu0
  %v170 = vadd.f32 0.0, %v169
  %v171 = vpop.f32.mrb[0].mxu0
  %172 = vmatprep.mubr.bf16.mxu0 0
  %173 = vmatmul.mubr.bf16.gmra.mrb[0].mxu0 %v40
  %v174 = vpop.f32.mrb[0].mxu0
  %v175 = vadd.f32 0.0, %v174
  %v176 = vpop.f32.mrb[0].mxu0
  %v177 = vpop.f32.mrb[0].mxu0
  %v178 = vadd.f32 0.0, %v177
  %v179 = vpop.f32.mrb[0].mxu0
  %180 = vmatprep.mubr.bf16.mxu0 0
  %181 = vmatmul.mubr.bf16.gmra.mrb[0].mxu0 %v41
  %v182 = vpop.f32.mrb[0].mxu0
  %v183 = vadd.f32 0.0, %v182
  %v184 = vpop.f32.mrb[0].mxu0
  %v185 = vpop.f32.mrb[0].mxu0
  %v186 = vadd.f32 0.0, %v185
  %v187 = vpop.f32.mrb[0].mxu0
  %188 = vmatprep.mubr.bf16.mxu0 0
  %189 = vmatmul.mubr.bf16.gmra.mrb[0].mxu0 %v42
  %v190 = vpop.f32.mrb[0].mxu0
  %v191 = vadd.f32 0.0, %v190
  %v192 = vpop.f32.mrb[0].mxu0
  %v193 = vpop.f32.mrb[0].mxu0
  %v194 = vadd.f32 0.0, %v193
  %v195 = vpop.f32.mrb[0].mxu0
  %196 = vmatprep.mubr.bf16.mxu0 0
  %197 = vmatmul.mubr.bf16.gmra.mrb[0].mxu0 %v43
  %v198 = vpop.f32.mrb[0].mxu0
  %v199 = vadd.f32 0.0, %v198
  %v200 = vpop.f32.mrb[0].mxu0
  %v201 = vpop.f32.mrb[0].mxu0
  %v202 = vadd.f32 0.0, %v201
  %v203 = vpop.f32.mrb[0].mxu0
  %204 = vmatprep.mubr.bf16.mxu0 0
  %205 = vmatmul.mubr.bf16.gmra.mrb[0].mxu0 %v44
  %v206 = vpop.f32.mrb[0].mxu0
  %v207 = vadd.f32 0.0, %v206
  %v208 = vpop.f32.mrb[0].mxu0
  %v209 = vpop.f32.mrb[0].mxu0
  %v210 = vadd.f32 0.0, %v209
  %v211 = vpop.f32.mrb[0].mxu0
  %212 = vmatprep.mubr.bf16.mxu0 0
  %213 = vmatmul.mubr.bf16.gmra.mrb[0].mxu0 %v45
  %v214 = vpop.f32.mrb[0].mxu0
  %v215 = vadd.f32 0.0, %v214
  %v216 = vpop.f32.mrb[0].mxu0
  %v217 = vpop.f32.mrb[0].mxu0
  %v218 = vadd.f32 0.0, %v217
  %v219 = vpop.f32.mrb[0].mxu0
  %220 = vmatprep.mubr.bf16.mxu0 0
  %221 = vmatmul.mubr.bf16.gmra.mrb[0].mxu0 %v46
  %v222 = vpop.f32.mrb[0].mxu0
  %v223 = vadd.f32 0.0, %v222
  %v224 = vpop.f32.mrb[0].mxu0
  %v225 = vpop.f32.mrb[0].mxu0
  %v226 = vadd.f32 0.0, %v225
  %v227 = vpop.f32.mrb[0].mxu0
  %228 = vdwg.mxu0
  %v229 = vadd.f32 %v68, %v167
  %v230 = vadd.f32 %v69, %v170
  %v231 = vadd.f32 %v70, %v175
  %v232 = vadd.f32 %v71, %v178
  %v233 = vadd.f32 %v72, %v183
  %v234 = vadd.f32 %v73, %v186
  %v235 = vadd.f32 %v74, %v191
  %v236 = vadd.f32 %v75, %v194
  %v237 = vadd.f32 %v76, %v199
  %v238 = vadd.f32 %v77, %v202
  %v239 = vadd.f32 %v78, %v207
  %v240 = vadd.f32 %v79, %v210
  %v241 = vadd.f32 %v80, %v215
  %v242 = vadd.f32 %v81, %v218
  %v243 = vadd.f32 %v82, %v223
  %v244 = vadd.f32 %v83, %v226
  %245 = vst [vmem:[#allocation2] sm:$0xff] %v229
  %246 = vst [vmem:[#allocation2 + $0x8] sm:$0xff] %v230
  %247 = vst [vmem:[#allocation2 + $0x10] sm:$0xff] %v231
  %248 = vst [vmem:[#allocation2 + $0x18] sm:$0xff] %v232
  %249 = vst [vmem:[#allocation2 + $0x20] sm:$0xff] %v233
  %250 = vst [vmem:[#allocation2 + $0x28] sm:$0xff] %v234
  %251 = vst [vmem:[#allocation2 + $0x30] sm:$0xff] %v235
  %252 = vst [vmem:[#allocation2 + $0x38] sm:$0xff] %v236
  %253 = vst [vmem:[#allocation2 + $0x40] sm:$0xff] %v237
  %254 = vst [vmem:[#allocation2 + $0x48] sm:$0xff] %v238
  %255 = vst [vmem:[#allocation2 + $0x50] sm:$0xff] %v239
  %256 = vst [vmem:[#allocation2 + $0x58] sm:$0xff] %v240
  %257 = vst [vmem:[#allocation2 + $0x60] sm:$0xff] %v241
  %258 = vst [vmem:[#allocation2 + $0x68] sm:$0xff] %v242
  %259 = vst [vmem:[#allocation2 + $0x70] sm:$0xff] %v243
  %260 = vst [vmem:[#allocation2 + $0x78] sm:$0xff] %v244
  // Predicated region
  $region18: #{gcn_forward_pallas.2} parent=0 // pred_check
    %p261 = pneg %p15
  $region19: #{gcn_forward_pallas.2} parent=0 // pred_check_branch
    %263 = sbr.rel (%p261) target = $region21
  $region20: #{gcn_forward_pallas.2} parent=0 // pred_region
    %v264 = vld [vmem:[#allocation2] sm:$0xff]
    %v265 = vld [vmem:[#allocation2 + $0x8] sm:$0xff]
    %v266 = vld [vmem:[#allocation2 + $0x10] sm:$0xff]
    %v267 = vld [vmem:[#allocation2 + $0x18] sm:$0xff]
    %v268 = vld [vmem:[#allocation2 + $0x20] sm:$0xff]
    %v269 = vld [vmem:[#allocation2 + $0x28] sm:$0xff]
    %v270 = vld [vmem:[#allocation2 + $0x30] sm:$0xff]
    %v271 = vld [vmem:[#allocation2 + $0x38] sm:$0xff]
    %v272 = vld [vmem:[#allocation2 + $0x40] sm:$0xff]
    %v273 = vld [vmem:[#allocation2 + $0x48] sm:$0xff]
    %v274 = vld [vmem:[#allocation2 + $0x50] sm:$0xff]
    %v275 = vld [vmem:[#allocation2 + $0x58] sm:$0xff]
    %v276 = vld [vmem:[#allocation2 + $0x60] sm:$0xff]
    %v277 = vld [vmem:[#allocation2 + $0x68] sm:$0xff]
    %v278 = vld [vmem:[#allocation2 + $0x70] sm:$0xff]
    %v279 = vld [vmem:[#allocation2 + $0x78] sm:$0xff]
    %v280 = vmax.f32 %v264, 0.0
    %v281 = vmax.f32 %v265, 0.0
    %v282 = vmax.f32 %v266, 0.0
    %v283 = vmax.f32 %v267, 0.0
    %v284 = vmax.f32 %v268, 0.0
    %v285 = vmax.f32 %v269, 0.0
    %v286 = vmax.f32 %v270, 0.0
    %v287 = vmax.f32 %v271, 0.0
    %v288 = vmax.f32 %v272, 0.0
    %v289 = vmax.f32 %v273, 0.0
    %v290 = vmax.f32 %v274, 0.0
    %v291 = vmax.f32 %v275, 0.0
    %v292 = vmax.f32 %v276, 0.0
    %v293 = vmax.f32 %v277, 0.0
    %v294 = vmax.f32 %v278, 0.0
    %v295 = vmax.f32 %v279, 0.0
    %v296 = vpack.c.bf16 %v281, %v280
    %v297 = vpack.c.bf16 %v283, %v282
    %v298 = vpack.c.bf16 %v285, %v284
    %v299 = vpack.c.bf16 %v287, %v286
    %v300 = vpack.c.bf16 %v289, %v288
    %v301 = vpack.c.bf16 %v291, %v290
    %v302 = vpack.c.bf16 %v293, %v292
    %v303 = vpack.c.bf16 %v295, %v294
    %v304 = vld [vmem:[%s2] sm:$0xf]
    %v305 = vld [vmem:[%s2 + $0x4] sm:$0xf]
    %v306 = vld [vmem:[%s2 + $0x8] sm:$0xf]
    %v307 = vld [vmem:[%s2 + $0xc] sm:$0xf]
    %v308 = vld [vmem:[%s2 + $0x10] sm:$0xf]
    %v309 = vld [vmem:[%s2 + $0x14] sm:$0xf]
    %v310 = vld [vmem:[%s2 + $0x18] sm:$0xf]
    %v311 = vld [vmem:[%s2 + $0x1c] sm:$0xf]
    %v312 = vld [vmem:[%s2 + $0x20] sm:$0xf]
    %v313 = vld [vmem:[%s2 + $0x24] sm:$0xf]
    %v314 = vld [vmem:[%s2 + $0x28] sm:$0xf]
    %v315 = vld [vmem:[%s2 + $0x2c] sm:$0xf]
    %v316 = vld [vmem:[%s2 + $0x30] sm:$0xf]
    %v317 = vld [vmem:[%s2 + $0x34] sm:$0xf]
    %v318 = vld [vmem:[%s2 + $0x38] sm:$0xf]
    %v319 = vld [vmem:[%s2 + $0x3c] sm:$0xf]
    %v336 = vunpack.c.l.b16 %v304
    %v337 = vunpack.c.l.b16 %v305
    %v338 = vunpack.c.l.b16 %v306
    %v339 = vunpack.c.l.b16 %v307
    %v340 = vunpack.c.l.b16 %v308
    %v341 = vunpack.c.l.b16 %v309
    %v342 = vunpack.c.l.b16 %v310
    %v343 = vunpack.c.l.b16 %v311
    %v344 = vunpack.c.l.b16 %v312
    %v345 = vunpack.c.l.b16 %v313
    %v346 = vunpack.c.l.b16 %v314
    %v347 = vunpack.c.l.b16 %v315
    %v348 = vunpack.c.l.b16 %v316
    %v349 = vunpack.c.l.b16 %v317
    %v350 = vunpack.c.l.b16 %v318
    %v351 = vunpack.c.l.b16 %v319
    %v352 = vpack.c.b16 %v337, %v336
    %v353 = vpack.c.b16 %v339, %v338
    %v354 = vpack.c.b16 %v341, %v340
    %v355 = vpack.c.b16 %v343, %v342
    %v356 = vpack.c.b16 %v345, %v344
    %v357 = vpack.c.b16 %v347, %v346
    %v358 = vpack.c.b16 %v349, %v348
    %v359 = vpack.c.b16 %v351, %v350
    %368 = vmatprep.subr.bf16.mxu0 0
    %369 = vmatpush1.bf16.msra.mxu0 %v352
    %370 = vmatprep.subr.bf16.mxu0 0
    %371 = vmatpush1.bf16.msra.mxu0 %v353
    %372 = vmatprep.subr.bf16.mxu0 0
    %373 = vmatpush1.bf16.msra.mxu0 %v354
    %374 = vmatprep.subr.bf16.mxu0 0
    %375 = vmatpush1.bf16.msra.mxu0 %v355
    %376 = vmatprep.subr.bf16.mxu0 0
    %377 = vmatpush1.bf16.msra.mxu0 %v356
    %378 = vmatprep.subr.bf16.mxu0 0
    %379 = vmatpush1.bf16.msra.mxu0 %v357
    %380 = vmatprep.subr.bf16.mxu0 0
    %381 = vmatpush1.bf16.msra.mxu0 %v358
    %382 = vmatprep.subr.bf16.mxu0 0
    %383 = vmatpush1.bf16.msra.mxu0 %v359
    %384 = vmatprep.subr.bf16.mxu0 0
    %385 = vmatpush1.bf16.msra.mxu0 0
    %386 = vmatprep.subr.bf16.mxu0 0
    %387 = vmatpush1.bf16.msra.mxu0 0
    %388 = vmatprep.subr.bf16.mxu0 0
    %389 = vmatpush1.bf16.msra.mxu0 0
    %390 = vmatprep.subr.bf16.mxu0 0
    %391 = vmatpush1.bf16.msra.mxu0 0
    %392 = vmatprep.subr.bf16.mxu0 0
    %393 = vmatpush1.bf16.msra.mxu0 0
    %394 = vmatprep.subr.bf16.mxu0 0
    %395 = vmatpush1.bf16.msra.mxu0 0
    %396 = vmatprep.subr.bf16.mxu0 0
    %397 = vmatpush1.bf16.msra.mxu0 0
    %398 = vmatprep.subr.bf16.mxu0 0
    %399 = vmatpush1.bf16.msra.mxu0 0
    %400 = vmatprep.mubr.bf16.mxu0 0
    %401 = vmatmul.mubr.bf16.gmra.mrb[0].mxu0 %v296
    %v402 = vpop.f32.mrb[0].mxu0
    %v403 = vadd.f32 0.0, %v402
    %v404 = vpop.f32.mrb[0].mxu0
    %v405 = vpop.f32.mrb[0].mxu0
    %v406 = vadd.f32 0.0, %v405
    %v407 = vpop.f32.mrb[0].mxu0
    %408 = vmatprep.mubr.bf16.mxu0 0
    %409 = vmatmul.mubr.bf16.gmra.mrb[0].mxu0 %v297
    %v410 = vpop.f32.mrb[0].mxu0
    %v411 = vadd.f32 0.0, %v410
    %v412 = vpop.f32.mrb[0].mxu0
    %v413 = vpop.f32.mrb[0].mxu0
    %v414 = vadd.f32 0.0, %v413
    %v415 = vpop.f32.mrb[0].mxu0
    %416 = vmatprep.mubr.bf16.mxu0 0
    %417 = vmatmul.mubr.bf16.gmra.mrb[0].mxu0 %v298
    %v418 = vpop.f32.mrb[0].mxu0
    %v419 = vadd.f32 0.0, %v418
    %v420 = vpop.f32.mrb[0].mxu0
    %v421 = vpop.f32.mrb[0].mxu0
    %v422 = vadd.f32 0.0, %v421
    %v423 = vpop.f32.mrb[0].mxu0
    %424 = vmatprep.mubr.bf16.mxu0 0
    %425 = vmatmul.mubr.bf16.gmra.mrb[0].mxu0 %v299
    %v426 = vpop.f32.mrb[0].mxu0
    %v427 = vadd.f32 0.0, %v426
    %v428 = vpop.f32.mrb[0].mxu0
    %v429 = vpop.f32.mrb[0].mxu0
    %v430 = vadd.f32 0.0, %v429
    %v431 = vpop.f32.mrb[0].mxu0
    %432 = vmatprep.mubr.bf16.mxu0 0
    %433 = vmatmul.mubr.bf16.gmra.mrb[0].mxu0 %v300
    %v434 = vpop.f32.mrb[0].mxu0
    %v435 = vadd.f32 0.0, %v434
    %v436 = vpop.f32.mrb[0].mxu0
    %v437 = vpop.f32.mrb[0].mxu0
    %v438 = vadd.f32 0.0, %v437
    %v439 = vpop.f32.mrb[0].mxu0
    %440 = vmatprep.mubr.bf16.mxu0 0
    %441 = vmatmul.mubr.bf16.gmra.mrb[0].mxu0 %v301
    %v442 = vpop.f32.mrb[0].mxu0
    %v443 = vadd.f32 0.0, %v442
    %v444 = vpop.f32.mrb[0].mxu0
    %v445 = vpop.f32.mrb[0].mxu0
    %v446 = vadd.f32 0.0, %v445
    %v447 = vpop.f32.mrb[0].mxu0
    %448 = vmatprep.mubr.bf16.mxu0 0
    %449 = vmatmul.mubr.bf16.gmra.mrb[0].mxu0 %v302
    %v450 = vpop.f32.mrb[0].mxu0
    %v451 = vadd.f32 0.0, %v450
    %v452 = vpop.f32.mrb[0].mxu0
    %v453 = vpop.f32.mrb[0].mxu0
    %v454 = vadd.f32 0.0, %v453
    %v455 = vpop.f32.mrb[0].mxu0
    %456 = vmatprep.mubr.bf16.mxu0 0
    %457 = vmatmul.mubr.bf16.gmra.mrb[0].mxu0 %v303
    %v458 = vpop.f32.mrb[0].mxu0
    %v459 = vadd.f32 0.0, %v458
    %v460 = vpop.f32.mrb[0].mxu0
    %v461 = vpop.f32.mrb[0].mxu0
    %v462 = vadd.f32 0.0, %v461
    %v463 = vpop.f32.mrb[0].mxu0
    %464 = vdwg.mxu0
    %v465 = vpack.c.bf16 %v406, %v403
    %v466 = vpack.c.bf16 %v414, %v411
    %v467 = vpack.c.bf16 %v422, %v419
    %v468 = vpack.c.bf16 %v430, %v427
    %v469 = vpack.c.bf16 %v438, %v435
    %v470 = vpack.c.bf16 %v446, %v443
    %v471 = vpack.c.bf16 %v454, %v451
    %v472 = vpack.c.bf16 %v462, %v459
    %v481 = vunpack.c.l.b16 %v465
    %v482 = vunpack.c.h.b16 %v465
    %v483 = vunpack.c.l.b16 %v466
    %v484 = vunpack.c.h.b16 %v466
    %v485 = vunpack.c.l.b16 %v467
    %v486 = vunpack.c.h.b16 %v467
    %v487 = vunpack.c.l.b16 %v468
    %v488 = vunpack.c.h.b16 %v468
    %v489 = vunpack.c.l.b16 %v469
    %v490 = vunpack.c.h.b16 %v469
    %v491 = vunpack.c.l.b16 %v470
    %v492 = vunpack.c.h.b16 %v470
    %v493 = vunpack.c.l.b16 %v471
    %v494 = vunpack.c.h.b16 %v471
    %v495 = vunpack.c.l.b16 %v472
    %v496 = vunpack.c.h.b16 %v472
    %v497 = vpack.c.b16 %v481, %v481
    %v498 = vpack.c.b16 %v482, %v482
    %v499 = vpack.c.b16 %v483, %v483
    %v500 = vpack.c.b16 %v484, %v484
    %v501 = vpack.c.b16 %v485, %v485
    %v502 = vpack.c.b16 %v486, %v486
    %v503 = vpack.c.b16 %v487, %v487
    %v504 = vpack.c.b16 %v488, %v488
    %v505 = vpack.c.b16 %v489, %v489
    %v506 = vpack.c.b16 %v490, %v490
    %v507 = vpack.c.b16 %v491, %v491
    %v508 = vpack.c.b16 %v492, %v492
    %v509 = vpack.c.b16 %v493, %v493
    %v510 = vpack.c.b16 %v494, %v494
    %v511 = vpack.c.b16 %v495, %v495
    %v512 = vpack.c.b16 %v496, %v496
    %529 = vst [vmem:[%s3] sm:$0xf] %v497
    %530 = vst [vmem:[%s3 + $0x4] sm:$0xf] %v498
    %531 = vst [vmem:[%s3 + $0x8] sm:$0xf] %v499
    %532 = vst [vmem:[%s3 + $0xc] sm:$0xf] %v500
    %533 = vst [vmem:[%s3 + $0x10] sm:$0xf] %v501
    %534 = vst [vmem:[%s3 + $0x14] sm:$0xf] %v502
    %535 = vst [vmem:[%s3 + $0x18] sm:$0xf] %v503
    %536 = vst [vmem:[%s3 + $0x1c] sm:$0xf] %v504
    %537 = vst [vmem:[%s3 + $0x20] sm:$0xf] %v505
    %538 = vst [vmem:[%s3 + $0x24] sm:$0xf] %v506
    %539 = vst [vmem:[%s3 + $0x28] sm:$0xf] %v507
    %540 = vst [vmem:[%s3 + $0x2c] sm:$0xf] %v508
    %541 = vst [vmem:[%s3 + $0x30] sm:$0xf] %v509
    %542 = vst [vmem:[%s3 + $0x34] sm:$0xf] %v510
    %543 = vst [vmem:[%s3 + $0x38] sm:$0xf] %v511
    %544 = vst [vmem:[%s3 + $0x3c] sm:$0xf] %v512
  $region21: #{gcn_forward_pallas.2} parent=0 // pred_fallthru
    _
  // Predicated region
  $region22: #{gcn_forward_pallas.2} parent=0 // pred_check
    _
  $region23: #{gcn_forward_pallas.2} parent=0 // pred_check_branch
    %546 = sbr.rel (0) target = $region25
  $region24: #{gcn_forward_pallas.2} parent=0 // pred_region
    _
  $region25: #{gcn_forward_pallas.2} parent=0 // pred_fallthru
    _
  // Predicated region
  $region26: #{gcn_forward_pallas.2} parent=0 // pred_check
    _
  $region27: #{gcn_forward_pallas.2} parent=0 // pred_check_branch
    %548 = sbr.rel (0) target = $region29
  $region28: #{gcn_forward_pallas.2} parent=0 // pred_region
    _
  $region29: #{gcn_forward_pallas.2} parent=0 // pred_fallthru
    _

</llo_original>
